<compile_context>
chip_gen: v6e
topology: v6e:2x2x1
jax: 0.10.0
libtpu: 0.0.40
codegen_flags: <defaults>
</compile_context>

<pallas_src>
import jax
import jax.numpy as jnp
from jax.experimental import pallas as pl
from jax.experimental.pallas import tpu as pltpu

LANE = 128
BLOCK_BYTE_BUDGET = 8 * 1024 * 1024   # 8 MiB per block (per the v6e/v7x review)
SMALL_ROWS = 512                       # <= this: single full-extent block


def _sigmoid_kernel(x_ref, o_ref):
    # Exact, numerically stable sigmoid, computed in f32 regardless of the
    # input dtype (free: the kernel is HBM-bound; also sidesteps v5e's lack
    # of bf16 VPU/EUP paths).  exp goes to the EUP; the rest is cheap VPU work.
    xf = x_ref[...].astype(jnp.float32)
    ez = jnp.exp(-jnp.abs(xf))
    denom = 1.0 + ez
    pos = 1.0 / denom          # x >= 0: 1 / (1 + exp(-x))
    neg = ez / denom           # x <  0: exp(x) / (1 + exp(x))
    o_ref[...] = jnp.where(xf >= 0, pos, neg).astype(o_ref.dtype)


def _round_up(v: int, m: int) -> int:
    return ((v + m - 1) // m) * m


def _sigmoid_2d(x2d: jax.Array) -> jax.Array:
    """Run the Pallas sigmoid kernel on a lane-dense (rows, 128) slab."""
    rows, _ = x2d.shape
    dtype = x2d.dtype
    itemsize = jnp.dtype(dtype).itemsize
    # Sublane packing: 8 for 4-byte, 16 for 2-byte, 32 for 1-byte dtypes.
    packing = max(8, 32 // itemsize)

    if rows <= SMALL_ROWS:
        # Tiny input: one full-extent block (block shape == array shape lifts
        # the (8,128) divisibility requirement; no pipeline prologue).
        block_rows = rows
        grid = (1,)
    else:
        # Byte-budgeted tile, rounded down to the sublane packing.
        max_tile_rows = max(
            packing,
            (BLOCK_BYTE_BUDGET // (LANE * itemsize)) // packing * packing,
        )
        # Guarantee grid >= 2 so v7x shards across both TensorCores and the
        # DMA-in / compute / DMA-out pipeline actually overlaps.
        block_rows = min(max_tile_rows, _round_up(pl.cdiv(rows, 2), packing))
        grid = (pl.cdiv(rows, block_rows),)   # last block overhang is masked

    block = (block_rows, LANE)
    block_bytes = block_rows * LANE * itemsize
    # in + out, each double-buffered, plus headroom; explicit so v5e's 16 MiB
    # scoped-VMEM default never bites, and still far under v7x's 64 MiB.
    vmem_limit = int(max(16 << 20, 4 * block_bytes + (8 << 20)))

    n = rows * LANE
    cost = pl.CostEstimate(
        flops=5 * n,
        transcendentals=n,
        bytes_accessed=2 * n * itemsize,
    )

    return pl.pallas_call(
        _sigmoid_kernel,
        out_shape=jax.ShapeDtypeStruct((rows, LANE), dtype),
        grid_spec=pltpu.PrefetchScalarGridSpec(
            num_scalar_prefetch=0,
            grid=grid,
            in_specs=[pl.BlockSpec(block, lambda i: (i, 0))],
            out_specs=pl.BlockSpec(block, lambda i: (i, 0)),
        ),
        compiler_params=pltpu.CompilerParams(
            dimension_semantics=("parallel",),
            vmem_limit_bytes=vmem_limit,
        ),
        cost_estimate=cost,
    )(x2d)


def tudui_forward(x: jax.Array) -> jax.Array:
    """Tudui.forward: elementwise sigmoid via a Pallas TPU kernel."""
    orig_shape = x.shape
    orig_dtype = x.dtype

    flat = x.reshape(-1)
    n = flat.shape[0]
    n_main = (n // LANE) * LANE

    if n_main == 0:
        # Fewer than 128 elements: not worth a kernel launch.
        return jax.nn.sigmoid(flat.astype(jnp.float32)).astype(
            orig_dtype).reshape(orig_shape)

    main = _sigmoid_2d(flat[:n_main].reshape(n_main // LANE, LANE)).reshape(-1)

    if n_main != n:
        # Ragged tail (<128 elems) in plain JAX; avoids a full-tensor pad +
        # slice HBM round-trip on the rare non-128-multiple case.
        tail = jax.nn.sigmoid(flat[n_main:].astype(jnp.float32)).astype(orig_dtype)
        main = jnp.concatenate([main, tail])

    return main.reshape(orig_shape)


if __name__ == "__main__":
    key = jax.random.PRNGKey(0)
    # NCHW input, small shape consistent with the module's usage.
    x = jax.random.normal(key, (2, 4, 16, 16), dtype=jnp.float32)

    y = jax.block_until_ready(tudui_forward(x))

    # Exact sigmoid in-kernel -> tight tolerance vs. plain-JAX reference.
    y_ref = jax.nn.sigmoid(x)
    assert y.shape == x.shape and y.dtype == x.dtype
    assert jnp.allclose(y, y_ref, atol=1e-6, rtol=1e-5), float(
        jnp.max(jnp.abs(y - y_ref)))

    print("KERNEL_OK")
</pallas_src>

<mosaic_0001>
module attributes {stable_mosaic.version = 11 : i64} {
  func.func @_sigmoid_kernel(%arg0: i32, %arg1: memref<16x128xf32, #tpu.memory_space<vmem>>, %arg2: memref<16x128xf32, #tpu.memory_space<vmem>>) attributes {dimension_semantics = [#tpu.dimension_semantics<parallel>], iteration_bounds = array<i64: 1>, scalar_prefetch = 0 : i64, scratch_operands = 0 : i64, tpu.core_type = #tpu.core_type<tc>, window_params = [{transform_indices = @transform_0, window_bounds = array<i64: 16, 128>}, {transform_indices = @transform_1, window_bounds = array<i64: 16, 128>}]} {
    %c0 = arith.constant 0 : index
    %c0_0 = arith.constant 0 : index
    %0 = vector.load %arg1[%c0, %c0_0] : memref<16x128xf32, #tpu.memory_space<vmem>>, vector<16x128xf32>
    %1 = math.absf %0 : vector<16x128xf32>
    %cst = arith.constant 0.000000e+00 : f32
    %2 = vector.broadcast %cst : f32 to vector<16x128xf32>
    %3 = arith.subf %2, %1 : vector<16x128xf32>
    %4 = math.exp %3 : vector<16x128xf32>
    %cst_1 = arith.constant 1.000000e+00 : f32
    %5 = vector.broadcast %cst_1 : f32 to vector<16x128xf32>
    %6 = arith.addf %5, %4 : vector<16x128xf32>
    %cst_2 = arith.constant 1.000000e+00 : f32
    %7 = vector.broadcast %cst_2 : f32 to vector<16x128xf32>
    %8 = arith.divf %7, %6 : vector<16x128xf32>
    %9 = arith.divf %4, %6 : vector<16x128xf32>
    %cst_3 = arith.constant 0.000000e+00 : f32
    %10 = vector.broadcast %cst_3 : f32 to vector<16x128xf32>
    %11 = arith.cmpf oge, %0, %10 : vector<16x128xf32>
    %12 = arith.select %11, %8, %9 : vector<16x128xi1>, vector<16x128xf32>
    %c0_4 = arith.constant 0 : index
    %c0_5 = arith.constant 0 : index
    %13 = vector.load %arg2[%c0_4, %c0_5] : memref<16x128xf32, #tpu.memory_space<vmem>>, vector<16x128xf32>
    tpu.vector_store %arg2[%c0_4, %c0_5], %12 {strides = array<i32>} : memref<16x128xf32, #tpu.memory_space<vmem>>, vector<16x128xf32>,
    return
  }
  func.func @transform_0(%arg0: i32) -> (i32, i32) {
    %c0_i32 = arith.constant 0 : i32
    %c0_i32_0 = arith.constant 0 : i32
    return %arg0, %c0_i32 : i32, i32
  }
  func.func @transform_1(%arg0: i32) -> (i32, i32) {
    %c0_i32 = arith.constant 0 : i32
    %c0_i32_0 = arith.constant 0 : i32
    return %arg0, %c0_i32 : i32, i32
  }
}

</mosaic_0001>

<llo_original>
// kernel: tpu_custom_call.1
$region0: #{tpu_custom_call.1}
  #allocation0 [shape = 'u32[]', space=smem, size = 0x4, offset = 0x4, fixed_abs, tag = 'smem constant byte address 0x4 - core index']
  #allocation1 [shape = 'u32[144,128]{1,0:T(1,128)}', space=vmem, size = 0x12000, scoped, tag = 'internal scratch']
  %s0 = inlined_call_operand.hbm [shape: f32[16,128], index: 0, kind: input, shape index: {}]
  %s1 = inlined_call_operand.hbm [shape: f32[16,128], index: 1, kind: output, shape index: {}]
  %s2 = sld [smem:[#allocation0]]
  $region18: #{tpu_custom_call.1} parent=0
    _
  %s4 = ssub.s32 1, %s2
  %s5 = scalar_select 0, %s4, %s2
  $region1: #{tpu_custom_call.1} parent=0
    #allocation2 [shape = 'u8[8192]{0}', space=vmem, size = 0x2000, scoped, tag = 'input window, operand 0, single buffered']
    #allocation3 [shape = 's32[1]{0}', space=sflag, size = 0x4, scoped, tag = 'scoped memory for tpu_custom_call.1']
    #allocation4 [shape = 's32[1]{0}', space=sflag, size = 0x4, scoped, tag = 'scoped memory for tpu_custom_call.1']
    #allocation5 [shape = 'u8[8192]{0}', space=vmem, size = 0x2000, scoped, tag = 'output window, operand 0, single buffered']
    %6 = vsyncpa [#allocation3], 0
    %7 = vsyncpa [#allocation4], 0
    // Predicated region
    $region2: #{tpu_custom_call.1} parent=1 // pred_check
      _
    $region3: #{tpu_custom_call.1} parent=1 // pred_check_branch
      %9 = sbr.rel (0) target = $region5
    $region4: #{tpu_custom_call.1} parent=1 // pred_region
      %s11 = ssub.s32 256, 256
      %12 = vsyncadd [#allocation3], %s11
      %s13 = sshll.u32 [#allocation2], 4
      %s14 = int_to_ptr.vmem [resolvable:$true] %s13
      %19 = dma.hbm_to_vmem [thread:$0]  %s0, 256, %s14, [#allocation3], 128, 128, 8
    $region5: #{tpu_custom_call.1} parent=1 // pred_fallthru
      _
    // Predicated region
    $region6: #{tpu_custom_call.1} parent=1 // pred_check
      _
    $region7: #{tpu_custom_call.1} parent=1 // pred_check_branch
      %21 = sbr.rel (0) target = $region9
    $region8: #{tpu_custom_call.1} parent=1 // pred_region
      %22 = dma.done [#allocation3], 256
    $region9: #{tpu_custom_call.1} parent=1 // pred_fallthru
      _
    %v23 = vld [vmem:[#allocation2] sm:$0xff]
    %v24 = vld [vmem:[#allocation2 + $0x8] sm:$0xff]
    %v25 = vand.u32 2147483647, %v23
    %v26 = vand.u32 2147483647, %v24
    %v27 = vsub.f32 0.0, %v25
    %v28 = vsub.f32 0.0, %v26
    %v29 = vmul.f32 %v27, 1.442695
    %v30 = vpow.pop %v29
    %v31 = vmul.f32 %v28, 1.442695
    %v32 = vpow.pop %v31
    %v33 = vadd.f32 %v30, 1.0
    %v34 = vadd.f32 %v32, 1.0
    %v35 = vrcp.pop %v33
    %v36 = vmul.f32 1.0, %v35
    %v37 = vrcp.pop %v34
    %v38 = vmul.f32 1.0, %v37
    %v39 = vmul.f32 %v30, %v35
    %v40 = vmul.f32 %v32, %v37
    %vm41 = vcmp.ge.f32.partialorder %v23, 0.0
    %vm42 = vcmp.ge.f32.partialorder %v24, 0.0
    %v43 = vsel %vm41, %v36, %v39
    %v44 = vsel %vm42, %v38, %v40
    %45 = vst [vmem:[#allocation5] sm:$0xff] %v43
    %46 = vst [vmem:[#allocation5 + $0x8] sm:$0xff] %v44
    // Predicated region
    $region10: #{tpu_custom_call.1} parent=1 // pred_check
      _
    $region11: #{tpu_custom_call.1} parent=1 // pred_check_branch
      %48 = sbr.rel (0) target = $region13
    $region12: #{tpu_custom_call.1} parent=1 // pred_region
      %s50 = ssub.s32 256, 256
      %51 = vsyncadd [#allocation4], %s50
      %s52 = sshll.u32 [#allocation5], 4
      %s53 = int_to_ptr.vmem [resolvable:$true] %s52
      %58 = dma.vmem_to_hbm [thread:$0]  %s53, 256, %s1, [#allocation4], 128, 128, 8
    $region13: #{tpu_custom_call.1} parent=1 // pred_fallthru
      _
    // Predicated region
    $region14: #{tpu_custom_call.1} parent=1 // pred_check
      _
    $region15: #{tpu_custom_call.1} parent=1 // pred_check_branch
      %60 = sbr.rel (0) target = $region17
    $region16: #{tpu_custom_call.1} parent=1 // pred_region
      %61 = dma.done [#allocation4], 256
    $region17: #{tpu_custom_call.1} parent=1 // pred_fallthru
      _
    %62 = vsyncpa [#allocation3], 1
    %63 = vsyncpa [#allocation4], 1

</llo_original>
